<compile_context>
chip_gen: v5e
topology: v5e:2x2
jax: 0.10.0
libtpu: 0.0.40
codegen_flags: <defaults>
</compile_context>

<pallas_src>
import functools

import jax
import jax.numpy as jnp
from jax.experimental import pallas as pl
from jax.experimental.pallas import tpu as pltpu

LANE = 128  # vreg lane width


def mlp_kernel(x_ref, w1_ref, b1_ref, w2_ref, b2_ref, o_ref):
    # Layer 1: (TB, K) @ (K, 128) on the MXU, f32 accumulate, + bias, relu.
    h = jnp.dot(x_ref[...], w1_ref[...], preferred_element_type=jnp.float32)
    h = jnp.maximum(h + b1_ref[...], 0.0)
    # Layer 2: (TB, 128) @ (128, 128) padded matmul (only column 0 is live),
    # + bias, sigmoid.  Lane-dense (TB, 128) store.
    z = jnp.dot(h, w2_ref[...], preferred_element_type=jnp.float32)
    z = z + b2_ref[...]
    o_ref[...] = jax.nn.sigmoid(z).astype(o_ref.dtype)


def _round_up(n, m):
    return ((n + m - 1) // m) * m


@functools.partial(jax.jit, static_argnames=("batch_tile",))
def neural_net_forward(x, w1, b1, w2, b2, *, batch_tile=128):
    """x: (B, K) f32; w1: (K, H); b1: (H,) or (1, H); w2: (H, 1); b2: (1,) or (1, 1)."""
    B, K = x.shape
    H = w1.shape[1]

    b1 = b1.reshape(1, -1)
    b2 = b2.reshape(1, -1)

    # --- Pad feature dims to the 128-lane width (zeros are exact no-ops). ---
    Hp = _round_up(H, LANE)
    Np = LANE  # padded layer-2 output width (logical width is 1)
    w1_p = jnp.zeros((K, Hp), jnp.float32).at[:, :H].set(w1)
    b1_p = jnp.zeros((1, Hp), jnp.float32).at[:, :H].set(b1)
    w2_p = jnp.zeros((Hp, Np), jnp.float32).at[:H, :1].set(w2)
    b2_p = jnp.zeros((1, Np), jnp.float32).at[:, :1].set(b2)

    # --- Tile / pad the batch dimension. ---
    TB = min(batch_tile, _round_up(B, 8))
    B_pad = _round_up(B, TB)
    x_p = x if B_pad == B else jnp.zeros((B_pad, K), x.dtype).at[:B, :].set(x)
    grid = (B_pad // TB,)

    out = pl.pallas_call(
        mlp_kernel,
        out_shape=jax.ShapeDtypeStruct((B_pad, Np), jnp.float32),
        grid_spec=pltpu.PrefetchScalarGridSpec(
            num_scalar_prefetch=0,
            grid=grid,
            in_specs=[
                pl.BlockSpec((TB, K), lambda i: (i, 0)),     # x: streamed per tile
                pl.BlockSpec((K, Hp), lambda i: (0, 0)),     # W1: resident
                pl.BlockSpec((1, Hp), lambda i: (0, 0)),     # b1: resident
                pl.BlockSpec((Hp, Np), lambda i: (0, 0)),    # W2 (padded): resident
                pl.BlockSpec((1, Np), lambda i: (0, 0)),     # b2 (padded): resident
            ],
            out_specs=pl.BlockSpec((TB, Np), lambda i: (i, 0)),
        ),
        compiler_params=pltpu.CompilerParams(
            dimension_semantics=("parallel",),
            vmem_limit_bytes=32 * 1024 * 1024,  # fits v7x scoped VMEM as well
        ),
    )(x_p, w1_p, b1_p, w2_p, b2_p)

    # Logical output is column 0 of the lane-dense slab, first B rows.
    return out[:B, :1]


def init_params(key, input_size, hidden_size):
    # Mimic nn.Linear's U(-1/sqrt(fan_in), 1/sqrt(fan_in)) init.
    k1, k2, k3, k4 = jax.random.split(key, 4)
    bound1 = 1.0 / jnp.sqrt(input_size)
    bound2 = 1.0 / jnp.sqrt(hidden_size)
    w1 = jax.random.uniform(k1, (input_size, hidden_size), jnp.float32,
                            -bound1, bound1)
    b1 = jax.random.uniform(k2, (1, hidden_size), jnp.float32, -bound1, bound1)
    w2 = jax.random.uniform(k3, (hidden_size, 1), jnp.float32, -bound2, bound2)
    b2 = jax.random.uniform(k4, (1, 1), jnp.float32, -bound2, bound2)
    return w1, b1, w2, b2


if __name__ == "__main__":
    key = jax.random.PRNGKey(0)
    batch, input_size, hidden_size = 8, 4, 32

    kx, kp = jax.random.split(key)
    x = jax.random.normal(kx, (batch, input_size), jnp.float32)
    w1, b1, w2, b2 = init_params(kp, input_size, hidden_size)

    out = neural_net_forward(x, w1, b1, w2, b2)
    out = jax.block_until_ready(out)

    # Reference check in plain JAX (unpadded params).
    h_ref = jnp.maximum(x @ w1 + b1, 0.0)
    ref = jax.nn.sigmoid(h_ref @ w2 + b2)
    assert out.shape == (batch, 1)
    assert jnp.allclose(out, ref, atol=1e-5, rtol=1e-5)

    print("KERNEL_OK")
</pallas_src>

<mosaic_0001>
module attributes {stable_mosaic.version = 11 : i64} {
  func.func @mlp_kernel(%arg0: i32, %arg1: memref<8x4xf32, #tpu.memory_space<vmem>>, %arg2: memref<4x128xf32, #tpu.memory_space<vmem>>, %arg3: memref<1x128xf32, #tpu.memory_space<vmem>>, %arg4: memref<128x128xf32, #tpu.memory_space<vmem>>, %arg5: memref<1x128xf32, #tpu.memory_space<vmem>>, %arg6: memref<8x128xf32, #tpu.memory_space<vmem>>) attributes {dimension_semantics = [#tpu.dimension_semantics<parallel>], iteration_bounds = array<i64: 1>, scalar_prefetch = 0 : i64, scratch_operands = 0 : i64, tpu.core_type = #tpu.core_type<tc>, window_params = [{transform_indices = @transform_0, window_bounds = array<i64: 8, 4>}, {pipeline_mode = #tpu.pipeline_mode<synchronous>, transform_indices = @transform_1, window_bounds = array<i64: 4, 128>}, {pipeline_mode = #tpu.pipeline_mode<synchronous>, transform_indices = @transform_2, window_bounds = array<i64: 1, 128>}, {pipeline_mode = #tpu.pipeline_mode<synchronous>, transform_indices = @transform_3, window_bounds = array<i64: 128, 128>}, {pipeline_mode = #tpu.pipeline_mode<synchronous>, transform_indices = @transform_4, window_bounds = array<i64: 1, 128>}, {transform_indices = @transform_5, window_bounds = array<i64: 8, 128>}]} {
    %c0 = arith.constant 0 : index
    %c0_0 = arith.constant 0 : index
    %0 = vector.load %arg1[%c0, %c0_0] : memref<8x4xf32, #tpu.memory_space<vmem>>, vector<8x4xf32>
    %c0_1 = arith.constant 0 : index
    %c0_2 = arith.constant 0 : index
    %1 = vector.load %arg2[%c0_1, %c0_2] : memref<4x128xf32, #tpu.memory_space<vmem>>, vector<4x128xf32>
    %cst = arith.constant dense<0.000000e+00> : vector<8x128xf32>
    %2 = tpu.matmul %0, %1, %cst {dimension_numbers = #tpu.dot_dimension_numbers<[1], [0], [0], [1], [0, 0, 1, 1], [], []>} : vector<8x4xf32>, vector<4x128xf32>, vector<8x128xf32> -> vector<8x128xf32>
    %c0_3 = arith.constant 0 : index
    %c0_4 = arith.constant 0 : index
    %3 = vector.load %arg3[%c0_3, %c0_4] : memref<1x128xf32, #tpu.memory_space<vmem>>, vector<1x128xf32>
    %4 = vector.broadcast %3 : vector<1x128xf32> to vector<8x128xf32>
    %5 = arith.addf %2, %4 : vector<8x128xf32>
    %cst_5 = arith.constant 0.000000e+00 : f32
    %6 = vector.broadcast %cst_5 : f32 to vector<8x128xf32>
    %7 = arith.maximumf %5, %6 : vector<8x128xf32>
    %c0_6 = arith.constant 0 : index
    %c0_7 = arith.constant 0 : index
    %8 = vector.load %arg4[%c0_6, %c0_7] : memref<128x128xf32, #tpu.memory_space<vmem>>, vector<128x128xf32>
    %cst_8 = arith.constant dense<0.000000e+00> : vector<8x128xf32>
    %9 = tpu.matmul %7, %8, %cst_8 {dimension_numbers = #tpu.dot_dimension_numbers<[1], [0], [0], [1], [0, 0, 1, 1], [], []>} : vector<8x128xf32>, vector<128x128xf32>, vector<8x128xf32> -> vector<8x128xf32>
    %c0_9 = arith.constant 0 : index
    %c0_10 = arith.constant 0 : index
    %10 = vector.load %arg5[%c0_9, %c0_10] : memref<1x128xf32, #tpu.memory_space<vmem>>, vector<1x128xf32>
    %11 = vector.broadcast %10 : vector<1x128xf32> to vector<8x128xf32>
    %12 = arith.addf %9, %11 : vector<8x128xf32>
    %13 = arith.negf %12 : vector<8x128xf32>
    %14 = math.exp %13 : vector<8x128xf32>
    %cst_11 = arith.constant 1.000000e+00 : f32
    %15 = vector.broadcast %cst_11 : f32 to vector<8x128xf32>
    %16 = arith.addf %15, %14 : vector<8x128xf32>
    %17 = arith.divf %15, %16 : vector<8x128xf32>
    %c0_12 = arith.constant 0 : index
    %c0_13 = arith.constant 0 : index
    %18 = vector.load %arg6[%c0_12, %c0_13] : memref<8x128xf32, #tpu.memory_space<vmem>>, vector<8x128xf32>
    tpu.vector_store %arg6[%c0_12, %c0_13], %17 {strides = array<i32>} : memref<8x128xf32, #tpu.memory_space<vmem>>, vector<8x128xf32>,
    return
  }
  func.func @transform_0(%arg0: i32) -> (i32, i32) {
    %c0_i32 = arith.constant 0 : i32
    %c0_i32_0 = arith.constant 0 : i32
    return %arg0, %c0_i32 : i32, i32
  }
  func.func @transform_1(%arg0: i32) -> (i32, i32) {
    %c0_i32 = arith.constant 0 : i32
    %c0_i32_0 = arith.constant 0 : i32
    %c0_i32_1 = arith.constant 0 : i32
    return %c0_i32, %c0_i32_0 : i32, i32
  }
  func.func @transform_2(%arg0: i32) -> (i32, i32) {
    %c0_i32 = arith.constant 0 : i32
    %c0_i32_0 = arith.constant 0 : i32
    %c0_i32_1 = arith.constant 0 : i32
    return %c0_i32, %c0_i32_0 : i32, i32
  }
  func.func @transform_3(%arg0: i32) -> (i32, i32) {
    %c0_i32 = arith.constant 0 : i32
    %c0_i32_0 = arith.constant 0 : i32
    %c0_i32_1 = arith.constant 0 : i32
    return %c0_i32, %c0_i32_0 : i32, i32
  }
  func.func @transform_4(%arg0: i32) -> (i32, i32) {
    %c0_i32 = arith.constant 0 : i32
    %c0_i32_0 = arith.constant 0 : i32
    %c0_i32_1 = arith.constant 0 : i32
    return %c0_i32, %c0_i32_0 : i32, i32
  }
  func.func @transform_5(%arg0: i32) -> (i32, i32) {
    %c0_i32 = arith.constant 0 : i32
    %c0_i32_0 = arith.constant 0 : i32
    return %arg0, %c0_i32 : i32, i32
  }
}

</mosaic_0001>

<llo_original>
// kernel: neural_net_forward.1
$region0: #{neural_net_forward.1}
  #allocation0 [shape = 'u32[]', space=smem, size = 0x4, offset = 0x4, fixed_abs, tag = 'smem constant byte address 0x4 - core index']
  #allocation1 [shape = 'u32[72,128]{1,0:T(1,128)}', space=vmem, size = 0x9000, scoped, tag = 'internal scratch']
  %s0 = inlined_call_operand.vmem [shape: f32[8,4], index: 0, kind: input, shape index: {}]
  %s1 = inlined_call_operand.vmem [shape: f32[4,128], index: 1, kind: input, shape index: {}]
  %s2 = inlined_call_operand.vmem [shape: f32[1,128], index: 2, kind: input, shape index: {}]
  %s3 = inlined_call_operand.vmem [shape: f32[128,128], index: 3, kind: input, shape index: {}]
  %s4 = inlined_call_operand.vmem [shape: f32[1,128], index: 4, kind: input, shape index: {}]
  %s5 = inlined_call_operand.vmem [shape: f32[8,128], index: 5, kind: output, shape index: {}]
  %s6 = sld [smem:[#allocation0]]
  $region30: #{neural_net_forward.1} parent=0
    _
  %s8 = ssub.s32 1, %s6
  %s9 = scalar_select 0, %s8, %s6
  // Predicated region
  $region2: #{neural_net_forward.1} parent=0 // pred_check
    _
  $region3: #{neural_net_forward.1} parent=0 // pred_check_branch
    %11 = sbr.rel (0) target = $region5
  $region4: #{neural_net_forward.1} parent=0 // pred_region
    _
  $region5: #{neural_net_forward.1} parent=0 // pred_fallthru
    _
  // Predicated region
  $region6: #{neural_net_forward.1} parent=0 // pred_check
    _
  $region7: #{neural_net_forward.1} parent=0 // pred_check_branch
    %13 = sbr.rel (0) target = $region9
  $region8: #{neural_net_forward.1} parent=0 // pred_region
    _
  $region9: #{neural_net_forward.1} parent=0 // pred_fallthru
    _
  // Predicated region
  $region10: #{neural_net_forward.1} parent=0 // pred_check
    _
  $region11: #{neural_net_forward.1} parent=0 // pred_check_branch
    %15 = sbr.rel (0) target = $region13
  $region12: #{neural_net_forward.1} parent=0 // pred_region
    _
  $region13: #{neural_net_forward.1} parent=0 // pred_fallthru
    _
  // Predicated region
  $region14: #{neural_net_forward.1} parent=0 // pred_check
    _
  $region15: #{neural_net_forward.1} parent=0 // pred_check_branch
    %17 = sbr.rel (0) target = $region17
  $region16: #{neural_net_forward.1} parent=0 // pred_region
    _
  $region17: #{neural_net_forward.1} parent=0 // pred_fallthru
    _
  // Predicated region
  $region18: #{neural_net_forward.1} parent=0 // pred_check
    _
  $region19: #{neural_net_forward.1} parent=0 // pred_check_branch
    %19 = sbr.rel (0) target = $region21
  $region20: #{neural_net_forward.1} parent=0 // pred_region
    _
  $region21: #{neural_net_forward.1} parent=0 // pred_fallthru
    _
  %v20 = vld [vmem:[%s0] sm:$0xff]
  %v21 = vld [vmem:[%s1] sm:$0xf]
  %v22 = vld [vmem:[%s2] sm:$0x1]
  %v24 = vperm.slane %v22, 0
  %vm26 = vcmask 31744
  %v28 = vsel %vm26, %v20, 0
  %vm30 = vcmask 1043456
  %v32 = vsel %vm30, %v21, 0
  %34 = vmatpush.msra.mxu0 0.0
  %35 = vmatpush.msra.mxu0 0.0
  %36 = vmatpush.msra.mxu0 0.0
  %37 = vmatpush.msra.mxu0 0.0
  %38 = vmatpush.msra.mxu0 0.0
  %39 = vmatpush.msra.mxu0 0.0
  %40 = vmatpush.msra.mxu0 0.0
  %41 = vmatpush.msra.mxu0 0.0
  %42 = vmatpush.msra.mxu0 0.0
  %43 = vmatpush.msra.mxu0 0.0
  %44 = vmatpush.msra.mxu0 0.0
  %45 = vmatpush.msra.mxu0 0.0
  %46 = vmatpush.msra.mxu0 0.0
  %47 = vmatpush.msra.mxu0 0.0
  %48 = vmatpush.msra.mxu0 0.0
  %49 = vmatpush.msra.mxu0 %v32
  %50 = vmatmul.f32.gmra.mxu0 %v28
  %v51 = vpop.f32.mrf.mxu0
  %v52 = vadd.f32 %v24, %v51
  %53 = vdwg.mxu0
  %v54 = vmax.f32 %v52, 0.0
  %v55 = vld [vmem:[%s3] sm:$0xff]
  %v56 = vld [vmem:[%s3 + $0x8] sm:$0xff]
  %v57 = vld [vmem:[%s3 + $0x10] sm:$0xff]
  %v58 = vld [vmem:[%s3 + $0x18] sm:$0xff]
  %v59 = vld [vmem:[%s3 + $0x20] sm:$0xff]
  %v60 = vld [vmem:[%s3 + $0x28] sm:$0xff]
  %v61 = vld [vmem:[%s3 + $0x30] sm:$0xff]
  %v62 = vld [vmem:[%s3 + $0x38] sm:$0xff]
  %v63 = vld [vmem:[%s3 + $0x40] sm:$0xff]
  %v64 = vld [vmem:[%s3 + $0x48] sm:$0xff]
  %v65 = vld [vmem:[%s3 + $0x50] sm:$0xff]
  %v66 = vld [vmem:[%s3 + $0x58] sm:$0xff]
  %v67 = vld [vmem:[%s3 + $0x60] sm:$0xff]
  %v68 = vld [vmem:[%s3 + $0x68] sm:$0xff]
  %v69 = vld [vmem:[%s3 + $0x70] sm:$0xff]
  %v70 = vld [vmem:[%s3 + $0x78] sm:$0xff]
  %v71 = vld [vmem:[%s4] sm:$0x1]
  %v73 = vperm.slane %v71, 0
  %75 = vmatpush.msra.mxu0 %v70
  %76 = vmatpush.msra.mxu0 %v69
  %77 = vmatpush.msra.mxu0 %v68
  %78 = vmatpush.msra.mxu0 %v67
  %79 = vmatpush.msra.mxu0 %v66
  %80 = vmatpush.msra.mxu0 %v65
  %81 = vmatpush.msra.mxu0 %v64
  %82 = vmatpush.msra.mxu0 %v63
  %83 = vmatpush.msra.mxu0 %v62
  %84 = vmatpush.msra.mxu0 %v61
  %85 = vmatpush.msra.mxu0 %v60
  %86 = vmatpush.msra.mxu0 %v59
  %87 = vmatpush.msra.mxu0 %v58
  %88 = vmatpush.msra.mxu0 %v57
  %89 = vmatpush.msra.mxu0 %v56
  %90 = vmatpush.msra.mxu0 %v55
  %91 = vmatmul.f32.gmra.mxu0 %v54
  %v92 = vpop.f32.mrf.mxu0
  %v93 = vadd.f32 %v73, %v92
  %94 = vdwg.mxu0
  %v95 = vxor.u32 %v93, 2147483648
  %v96 = vmul.f32 %v95, 1.442695
  %v97 = vpow.pop %v96
  %v98 = vadd.f32 %v97, 1.0
  %v99 = vrcp.pop %v98
  %v100 = vmul.f32 %v98, %v99
  %v101 = vsub.f32 1.0, %v100
  %v102 = vmul.f32 %v99, %v101
  %v103 = vadd.f32 %v99, %v102
  %vm104 = vweird.f32 %v98
  %vm105 = vweird.f32 %v99
  %vm106 = vmor %vm104, %vm105
  %v107 = vsel %vm106, %v99, %v103
  %v108 = vand.u32 2147483647, %v98
  %vm109 = vcmp.eq.f32.partialorder %v108, 8.507059e+37
  %v110 = vand.u32 %v98, 2147483648
  %v111 = vor.u32 1.1754944e-38, %v110
  %v112 = vsel %vm109, %v111, %v107
  %v113 = vmul.f32 1.0, %v112
  %114 = vst [vmem:[%s5] sm:$0xff] %v113
  // Predicated region
  $region22: #{neural_net_forward.1} parent=0 // pred_check
    _
  $region23: #{neural_net_forward.1} parent=0 // pred_check_branch
    %116 = sbr.rel (0) target = $region25
  $region24: #{neural_net_forward.1} parent=0 // pred_region
    _
  $region25: #{neural_net_forward.1} parent=0 // pred_fallthru
    _
  // Predicated region
  $region26: #{neural_net_forward.1} parent=0 // pred_check
    _
  $region27: #{neural_net_forward.1} parent=0 // pred_check_branch
    %118 = sbr.rel (0) target = $region29
  $region28: #{neural_net_forward.1} parent=0 // pred_region
    _
  $region29: #{neural_net_forward.1} parent=0 // pred_fallthru
    _

</llo_original>
